<compile_context>
chip_gen: v6e
topology: v6e:2x2x1
jax: 0.10.0
libtpu: 0.0.40
codegen_flags: <defaults>
</compile_context>

<pallas_src>
import jax
import jax.numpy as jnp
from jax.experimental import pallas as pl
from jax.experimental.pallas import tpu as pltpu


def _rmsnorm_kernel(x_ref, w_ref, o_ref, *, eps, inv_dim):
    # x_ref: (rows_tile, dim)   w_ref: (1, dim)   o_ref: (rows_tile, dim)
    x_f32 = x_ref[...].astype(jnp.float32)
    # mean of squares over the hidden axis: sum (XLU) * constant reciprocal
    ms = jnp.sum(x_f32 * x_f32, axis=-1, keepdims=True) * inv_dim
    inv = jax.lax.rsqrt(ms + eps)                       # EUP
    # Match PyTorch: weight * self._norm(x).type_as(x)
    #   -> cast normalized value to x.dtype first, then multiply the weight
    #      in the output dtype (also trims f32 VPU work for bf16 inputs).
    normed = (x_f32 * inv).astype(o_ref.dtype)
    o_ref[...] = w_ref[...].astype(o_ref.dtype) * normed


def _sublane_multiple(itemsize):
    # f32 -> 8 sublanes, bf16 -> 16, int8/fp8 -> 32
    return 8 * max(1, 4 // max(1, itemsize))


def _block_vmem_cost(rows_per_block, dim, itemsize):
    """Approximate VMEM footprint for one grid step.

    2x double-buffered input + output blocks, plus ~3 f32-sized intermediates
    (the upcast, x*x, and the scaled product) that get materialized for tiles
    much larger than the vreg file.
    """
    io = 2 * 2 * rows_per_block * dim * itemsize
    f32_tmp = 3 * rows_per_block * dim * 4
    return io + f32_tmp


def _pick_rows_per_block(rows, dim, itemsize,
                         target_block_bytes=4 << 20,
                         min_grid_steps=8,
                         vmem_budget_bytes=32 << 20):
    """Bandwidth-driven row tile.

    ~4 MiB blocks (streaming sweeps plateau near the HBM roofline at 1-4 MiB),
    capped so the grid has >= min_grid_steps steps (v7x megacore load balance),
    rounded to the dtype's sublane multiple, and shrunk until the per-step
    VMEM footprint (double-buffered I/O + f32 intermediates) fits the budget.
    """
    sub = _sublane_multiple(itemsize)

    rpb = target_block_bytes // max(1, dim * itemsize)

    # Keep enough grid steps so both v7x TensorCores (and the pipeline) are fed.
    cap = rows // min_grid_steps
    if cap >= sub:
        rpb = min(rpb, cap)

    rpb = max(sub, (rpb // sub) * sub)

    # Shrink until the per-step VMEM footprint fits the compute budget.
    while rpb > sub and _block_vmem_cost(rpb, dim, itemsize) > vmem_budget_bytes:
        rpb = max(sub, (rpb // 2 // sub) * sub)

    if _block_vmem_cost(sub, dim, itemsize) > vmem_budget_bytes:
        # TODO(synk): for very large hidden sizes, split `dim` over a second
        # "arbitrary" grid axis with a per-row partial-sum accumulator
        # (pl.when init/finalize) instead of failing here.
        raise ValueError(
            f"RMSNorm: minimum block ({sub} x {dim}, itemsize={itemsize}) does "
            f"not fit the VMEM budget of {vmem_budget_bytes} bytes.")

    if rpb >= rows:
        # Block equals full array extent along rows -> always a legal block.
        return rows
    return rpb


def rmsnorm(x, weight, eps=1e-6, rows_per_block=None):
    """x: (..., dim), weight: (dim,). Returns same shape/dtype as x."""
    orig_shape = x.shape
    dim = orig_shape[-1]
    rows = 1
    for s in orig_shape[:-1]:
        rows *= s
    x2 = x.reshape(rows, dim)
    w2 = weight.reshape(1, dim)

    itemsize = jnp.dtype(x.dtype).itemsize
    sub = _sublane_multiple(itemsize)
    if rows_per_block is None:
        rows_per_block = _pick_rows_per_block(rows, dim, itemsize)
    else:
        # Round a user-supplied tile to the dtype's sublane multiple.
        rows_per_block = max(sub, (int(rows_per_block) // sub) * sub)
    rows_per_block = min(rows_per_block, rows)

    grid = (pl.cdiv(rows, rows_per_block),)

    # Explicit scoped-VMEM limit with headroom (covers v5e 16 MiB / v6e 32 MiB
    # defaults; stays <= 48 MiB so it fits v7x's 64 MiB physical VMEM).
    block_cost = _block_vmem_cost(rows_per_block, dim, itemsize)
    weight_cost = 2 * dim * itemsize
    vmem_limit = int(min(48 << 20, max(16 << 20, block_cost + weight_cost + (4 << 20))))

    cost = pl.CostEstimate(
        flops=4 * rows * dim,                     # square, sum, scale, weight
        transcendentals=rows,                     # one rsqrt per row
        bytes_accessed=2 * rows * dim * itemsize + dim * itemsize,
    )

    kernel = lambda x_ref, w_ref, o_ref: _rmsnorm_kernel(
        x_ref, w_ref, o_ref, eps=eps, inv_dim=1.0 / dim)

    out = pl.pallas_call(
        kernel,
        out_shape=jax.ShapeDtypeStruct((rows, dim), x.dtype),
        grid_spec=pltpu.PrefetchScalarGridSpec(
            num_scalar_prefetch=0,
            grid=grid,
            in_specs=[
                pl.BlockSpec((rows_per_block, dim), lambda i: (i, 0)),
                pl.BlockSpec((1, dim), lambda i: (0, 0)),
            ],
            out_specs=pl.BlockSpec((rows_per_block, dim), lambda i: (i, 0)),
        ),
        compiler_params=pltpu.CompilerParams(
            dimension_semantics=("parallel",),
            vmem_limit_bytes=vmem_limit,
        ),
        cost_estimate=cost,
    )(x2, w2)
    return out.reshape(orig_shape)


def rmsnorm_ref(x, weight, eps=1e-6):
    # Same convention as the kernel (and the PyTorch module):
    # weight * _norm(x).type_as(x)
    x_f32 = x.astype(jnp.float32)
    normed = (x_f32 * jax.lax.rsqrt(
        jnp.mean(x_f32 * x_f32, axis=-1, keepdims=True) + eps)).astype(x.dtype)
    return weight.astype(x.dtype) * normed


if __name__ == "__main__":
    key = jax.random.PRNGKey(0)
    batch, seq, dim = 2, 8, 32
    x = jax.random.normal(key, (batch, seq, dim), dtype=jnp.float32)
    # nn.Parameter(torch.ones(dim)) -> deterministic ones
    weight = jnp.ones((dim,), dtype=jnp.float32)

    ref = rmsnorm_ref(x, weight, eps=1e-6)

    # Default (bandwidth-driven) tiling.
    out = rmsnorm(x, weight, eps=1e-6)
    out = jax.block_until_ready(out)
    assert out.shape == x.shape and out.dtype == x.dtype
    assert jnp.allclose(out, ref, atol=1e-5, rtol=1e-5)

    # Explicit small tile to exercise a multi-step pipelined grid.
    out2 = rmsnorm(x, weight, eps=1e-6, rows_per_block=8)
    out2 = jax.block_until_ready(out2)
    assert jnp.allclose(out2, ref, atol=1e-5, rtol=1e-5)

    print("KERNEL_OK")
</pallas_src>

<mosaic_0001>
module attributes {stable_mosaic.version = 11 : i64} {
  func.func @_lambda_(%arg0: i32, %arg1: memref<16x32xf32, #tpu.memory_space<vmem>>, %arg2: memref<1x32xf32, #tpu.memory_space<vmem>>, %arg3: memref<16x32xf32, #tpu.memory_space<vmem>>) attributes {dimension_semantics = [#tpu.dimension_semantics<parallel>], iteration_bounds = array<i64: 1>, scalar_prefetch = 0 : i64, scratch_operands = 0 : i64, tpu.core_type = #tpu.core_type<tc>, window_params = [{transform_indices = @transform_0, window_bounds = array<i64: 16, 32>}, {pipeline_mode = #tpu.pipeline_mode<synchronous>, transform_indices = @transform_1, window_bounds = array<i64: 1, 32>}, {transform_indices = @transform_2, window_bounds = array<i64: 16, 32>}]} {
    %c0 = arith.constant 0 : index
    %c0_0 = arith.constant 0 : index
    %0 = vector.load %arg1[%c0, %c0_0] : memref<16x32xf32, #tpu.memory_space<vmem>>, vector<16x32xf32>
    %1 = arith.mulf %0, %0 : vector<16x32xf32>
    %cst = arith.constant dense<0.000000e+00> : vector<16xf32>
    %2 = vector.multi_reduction <add>, %1, %cst [1] : vector<16x32xf32> to vector<16xf32>
    %3 = vector.shape_cast %2 : vector<16xf32> to vector<16x1xf32>
    %cst_1 = arith.constant 3.125000e-02 : f32
    %4 = vector.broadcast %cst_1 : f32 to vector<16x1xf32>
    %5 = arith.mulf %3, %4 : vector<16x1xf32>
    %cst_2 = arith.constant 9.99999997E-7 : f32
    %6 = vector.broadcast %cst_2 : f32 to vector<16x1xf32>
    %7 = arith.addf %5, %6 : vector<16x1xf32>
    %8 = math.rsqrt %7 : vector<16x1xf32>
    %9 = vector.broadcast %8 : vector<16x1xf32> to vector<16x32xf32>
    %10 = arith.mulf %0, %9 : vector<16x32xf32>
    %c0_3 = arith.constant 0 : index
    %c0_4 = arith.constant 0 : index
    %11 = vector.load %arg2[%c0_3, %c0_4] : memref<1x32xf32, #tpu.memory_space<vmem>>, vector<1x32xf32>
    %12 = vector.broadcast %11 : vector<1x32xf32> to vector<16x32xf32>
    %13 = arith.mulf %12, %10 : vector<16x32xf32>
    %c0_5 = arith.constant 0 : index
    %c0_6 = arith.constant 0 : index
    %14 = vector.load %arg3[%c0_5, %c0_6] : memref<16x32xf32, #tpu.memory_space<vmem>>, vector<16x32xf32>
    tpu.vector_store %arg3[%c0_5, %c0_6], %13 {strides = array<i32>} : memref<16x32xf32, #tpu.memory_space<vmem>>, vector<16x32xf32>,
    return
  }
  func.func @transform_0(%arg0: i32) -> (i32, i32) {
    %c0_i32 = arith.constant 0 : i32
    %c0_i32_0 = arith.constant 0 : i32
    return %arg0, %c0_i32 : i32, i32
  }
  func.func @transform_1(%arg0: i32) -> (i32, i32) {
    %c0_i32 = arith.constant 0 : i32
    %c0_i32_0 = arith.constant 0 : i32
    %c0_i32_1 = arith.constant 0 : i32
    return %c0_i32, %c0_i32_0 : i32, i32
  }
  func.func @transform_2(%arg0: i32) -> (i32, i32) {
    %c0_i32 = arith.constant 0 : i32
    %c0_i32_0 = arith.constant 0 : i32
    return %arg0, %c0_i32 : i32, i32
  }
}

</mosaic_0001>

<llo_original>
// kernel: tpu_custom_call.1
$region0: #{tpu_custom_call.1}
  #allocation0 [shape = 'u32[]', space=smem, size = 0x4, offset = 0x4, fixed_abs, tag = 'smem constant byte address 0x4 - core index']
  #allocation1 [shape = 'u32[144,128]{1,0:T(1,128)}', space=vmem, size = 0x12000, scoped, tag = 'internal scratch']
  %s0 = inlined_call_operand.hbm [shape: f32[16,32], index: 0, kind: input, shape index: {}]
  %s1 = inlined_call_operand.vmem [shape: f32[1,32], index: 1, kind: input, shape index: {}]
  %s2 = inlined_call_operand.hbm [shape: f32[16,32], index: 2, kind: output, shape index: {}]
  %s3 = sld [smem:[#allocation0]]
  $region22: #{tpu_custom_call.1} parent=0
    _
  %s5 = ssub.s32 1, %s3
  %s6 = scalar_select 0, %s5, %s3
  $region1: #{tpu_custom_call.1} parent=0
    #allocation2 [shape = 'u8[8192]{0}', space=vmem, size = 0x2000, scoped, tag = 'input window, operand 0, single buffered']
    #allocation3 [shape = 's32[1]{0}', space=sflag, size = 0x4, scoped, tag = 'scoped memory for tpu_custom_call.1']
    #allocation4 [shape = 's32[1]{0}', space=sflag, size = 0x4, scoped, tag = 'scoped memory for tpu_custom_call.1']
    #allocation5 [shape = 'u8[8192]{0}', space=vmem, size = 0x2000, scoped, tag = 'output window, operand 0, single buffered']
    %7 = vsyncpa [#allocation3], 0
    %8 = vsyncpa [#allocation4], 0
    // Predicated region
    $region2: #{tpu_custom_call.1} parent=1 // pred_check
      _
    $region3: #{tpu_custom_call.1} parent=1 // pred_check_branch
      %10 = sbr.rel (0) target = $region5
    $region4: #{tpu_custom_call.1} parent=1 // pred_region
      %s12 = ssub.s32 256, 256
      %13 = vsyncadd [#allocation3], %s12
      %s14 = sshll.u32 [#allocation2], 4
      %s15 = int_to_ptr.vmem [resolvable:$true] %s14
      %20 = dma.hbm_to_vmem [thread:$0]  %s0, 256, %s15, [#allocation3], 128, 128, 8
    $region5: #{tpu_custom_call.1} parent=1 // pred_fallthru
      _
    // Predicated region
    $region6: #{tpu_custom_call.1} parent=1 // pred_check
      _
    $region7: #{tpu_custom_call.1} parent=1 // pred_check_branch
      %22 = sbr.rel (0) target = $region9
    $region8: #{tpu_custom_call.1} parent=1 // pred_region
      _
    $region9: #{tpu_custom_call.1} parent=1 // pred_fallthru
      _
    // Predicated region
    $region10: #{tpu_custom_call.1} parent=1 // pred_check
      _
    $region11: #{tpu_custom_call.1} parent=1 // pred_check_branch
      %24 = sbr.rel (0) target = $region13
    $region12: #{tpu_custom_call.1} parent=1 // pred_region
      %25 = dma.done [#allocation3], 256
    $region13: #{tpu_custom_call.1} parent=1 // pred_fallthru
      _
    %v26 = vld [vmem:[#allocation2] sm:$0xff]
    %v27 = vld [vmem:[#allocation2 + $0x8] sm:$0xff]
    %v28 = vmul.f32 %v26, %v26
    %v29 = vmul.f32 %v27, %v27
    %vm30 = vcmask 261120
    %v31 = vsel %vm30, %v28, 0.0
    %32 = vadd.xlane.f32.xlu0 %v31
    %v33 = vpop.xlane.xlu0 %32
    %v34 = vsel %vm30, %v29, 0.0
    %35 = vadd.xlane.f32.xlu0 %v34
    %v36 = vpop.xlane.xlu0 %35
    %v37 = vmul.f32 %v33, 0.03125
    %v38 = vmul.f32 %v36, 0.03125
    %v39 = vadd.f32 %v37, 1e-06
    %v40 = vadd.f32 %v38, 1e-06
    %v41 = vrsqrt.pop %v39
    %v42 = vrsqrt.pop %v40
    %v43 = vmul.f32 %v26, %v41
    %v44 = vmul.f32 %v27, %v42
    %v45 = vld [vmem:[%s1] sm:$0x1]
    %v47 = vlaneseq
    %v48 = vshrl.u32 %v47, 7
    %v49 = vsub.s32 0, %v48
    %v50 = vrot.slane %v45, %v49
    %v52 = vmul.f32 %v50, %v43
    %v53 = vmul.f32 %v50, %v44
    %54 = vst.msk [vmem:[#allocation5] sm:$0xff] %vm30, %v52
    %55 = vst.msk [vmem:[#allocation5 + $0x8] sm:$0xff] %vm30, %v53
    // Predicated region
    $region14: #{tpu_custom_call.1} parent=1 // pred_check
      _
    $region15: #{tpu_custom_call.1} parent=1 // pred_check_branch
      %57 = sbr.rel (0) target = $region17
    $region16: #{tpu_custom_call.1} parent=1 // pred_region
      %s59 = ssub.s32 256, 256
      %60 = vsyncadd [#allocation4], %s59
      %s61 = sshll.u32 [#allocation5], 4
      %s62 = int_to_ptr.vmem [resolvable:$true] %s61
      %67 = dma.vmem_to_hbm [thread:$0]  %s62, 256, %s2, [#allocation4], 128, 128, 8
    $region17: #{tpu_custom_call.1} parent=1 // pred_fallthru
      _
    // Predicated region
    $region18: #{tpu_custom_call.1} parent=1 // pred_check
      _
    $region19: #{tpu_custom_call.1} parent=1 // pred_check_branch
      %69 = sbr.rel (0) target = $region21
    $region20: #{tpu_custom_call.1} parent=1 // pred_region
      %70 = dma.done [#allocation4], 256
    $region21: #{tpu_custom_call.1} parent=1 // pred_fallthru
      _
    %71 = vsyncpa [#allocation3], 1
    %72 = vsyncpa [#allocation4], 1

</llo_original>
